<compile_context>
chip_gen: v5e
topology: v5e:2x2
jax: 0.10.0
libtpu: 0.0.40
codegen_flags: <defaults>
</compile_context>

<pallas_src>
import math

import jax
import jax.numpy as jnp
from jax import lax
from jax.experimental import pallas as pl
from jax.experimental.pallas import tpu as pltpu


# ----------------------------------------------------------------------------
# Helpers
# ----------------------------------------------------------------------------

def _foreach_row(rows, body):
    """Run body(r) for r in [0, rows): straight-line for small tiles, rolled
    lax.fori_loop (unroll=8) for large tiles so code size stays sane."""
    if rows <= 32:
        for r in range(rows):
            body(r)
    else:
        def loop_body(r, carry):
            body(r)
            return carry
        lax.fori_loop(0, rows, loop_body, 0, unroll=8)


# ----------------------------------------------------------------------------
# Pallas kernel
# ----------------------------------------------------------------------------

def _make_bert_embedding_kernel(*, rows, inner_n, n_tiles, dropout_rate, use_dropout):
    inv_keep = 1.0 / (1.0 - dropout_rate) if dropout_rate < 1.0 else 0.0

    def impl(ids_ref, pe_ref, rand_ref, embed_hbm, out_ref, row_buf, sem):
        outer = pl.program_id(0)
        inner = pl.program_id(1)
        tile = outer * inner_n + inner          # flat sequence index
        slot = inner % 2                        # 2-slot gather buffer

        def issue_gather(tile_idx, slot_idx):
            # Clamp so the (runtime-dead) prefetch branch at the last inner step can
            # never form an out-of-range address. In taken branches the clamp is a no-op.
            base = jnp.minimum(tile_idx, n_tiles - 1) * rows

            def start_row(r):
                tok = ids_ref[base + r]
                pltpu.make_async_copy(
                    embed_hbm.at[pl.ds(tok, 1), :],
                    row_buf.at[slot_idx, pl.ds(r, 1), :],
                    sem.at[slot_idx],
                ).start()

            _foreach_row(rows, start_row)

        # Prime the 2-slot pipeline at the start of every sequential (inner) sweep --
        # per chunk, not just at global step 0 -- so megacore sharding of the parallel
        # outer axis stays correct (each core primes its own chunk).
        @pl.when(inner == 0)
        def _():
            issue_gather(tile, slot)

        # Prefetch the NEXT sequence's rows into the other slot *before* waiting on the
        # current slot: the SMEM id reads stay ahead of .wait() (keeps sst->sld
        # forwarding alive) and the gather overlaps this step's add + store.
        @pl.when(inner + 1 < inner_n)
        def _():
            issue_gather(tile + 1, 1 - slot)

        # Wait for the current slot's `rows` copies. Waits only match semaphore +
        # transfer size, and every row copy is (1, H), so a fixed source slice is fine.
        def wait_row(r):
            pltpu.make_async_copy(
                embed_hbm.at[pl.ds(0, 1), :],
                row_buf.at[slot, pl.ds(r, 1), :],
                sem.at[slot],
            ).wait()

        _foreach_row(rows, wait_row)

        # token embedding + positional embedding: one lane-dense VPU add (promotes to
        # f32 if the table is bf16 -- keeps v5e off bf16 VPU emulation).
        x = row_buf[slot] + pe_ref[...]

        if use_dropout:
            keep = rand_ref[...] >= jnp.float32(dropout_rate)
            x = jnp.where(keep, x * jnp.float32(inv_keep), jnp.zeros_like(x))

        out_ref[...] = x.astype(out_ref.dtype)

    if use_dropout:
        def kernel(ids_ref, pe_ref, rand_ref, embed_hbm, out_ref, row_buf, sem):
            impl(ids_ref, pe_ref, rand_ref, embed_hbm, out_ref, row_buf, sem)
    else:
        def kernel(ids_ref, pe_ref, embed_hbm, out_ref, row_buf, sem):
            impl(ids_ref, pe_ref, None, embed_hbm, out_ref, row_buf, sem)
    return kernel


# ----------------------------------------------------------------------------
# Wrapper
# ----------------------------------------------------------------------------

def bert_embedding(tokens, embed_w, pe, *, dropout_rate=0.1, train=False, rng=None,
                   num_chunks=2):
    """BERTEmbedding.forward. tokens: [B,S] int, embed_w: [V,H], pe: [max_len,H]."""
    B, S = tokens.shape
    V, H = embed_w.shape
    L, Hp = pe.shape
    assert Hp == H and L >= S
    assert S % 8 == 0, "sequence length must be a multiple of 8 (sublane tiling)"
    if embed_w.dtype == jnp.bfloat16:
        assert S % 16 == 0, "bf16 table needs S % 16 == 0 for full-vreg sublane packing"
    M = B * S
    ids = tokens.reshape(M).astype(jnp.int32)
    pe_s = pe[:S]                                  # single VMEM-resident (S, H) block

    # Outer "parallel" axis (megacore sharding, keep it >= 2 when possible), inner
    # "arbitrary" axis carries the cross-step double-buffered gather.
    num_chunks = max(1, min(int(num_chunks), B))
    while B % num_chunks:
        num_chunks -= 1
    inner_n = B // num_chunks

    use_dropout = bool(train) and float(dropout_rate) > 0.0
    if use_dropout and rng is None:
        rng = jax.random.PRNGKey(0)

    kernel = _make_bert_embedding_kernel(
        rows=S, inner_n=inner_n, n_tiles=B,
        dropout_rate=float(dropout_rate), use_dropout=use_dropout)

    def tile_idx(o, i, ids_ref):
        return (o * inner_n + i, 0)

    in_specs = [pl.BlockSpec((S, H), lambda o, i, ids_ref: (0, 0))]   # pe: resident
    args = [ids, pe_s]
    if use_dropout:
        in_specs.append(pl.BlockSpec((S, H), tile_idx))               # uniform randoms
        args.append(jax.random.uniform(rng, (M, H), jnp.float32))
    in_specs.append(pl.BlockSpec(memory_space=pl.ANY))                # table stays in HBM
    args.append(embed_w)

    # VMEM budget (v7x: 64 MiB physical / 32 MiB default scoped): pe block + double-
    # buffered out (+ rand) tiles + 2-slot gather buffer, with 2x headroom.
    esize = jnp.dtype(embed_w.dtype).itemsize
    tile_f32, tile_emb = S * H * 4, S * H * esize
    vmem_est = (tile_f32 + 2 * tile_emb + (2 * tile_f32 if use_dropout else 0)
                + 2 * tile_emb)
    vmem_limit = int(min(96 * 2**20, max(32 * 2**20, 2 * vmem_est)))

    out = pl.pallas_call(
        kernel,
        out_shape=jax.ShapeDtypeStruct((M, H), embed_w.dtype),
        grid_spec=pltpu.PrefetchScalarGridSpec(
            num_scalar_prefetch=1,                      # flattened token ids -> SMEM
            grid=(num_chunks, inner_n),
            in_specs=in_specs,
            out_specs=pl.BlockSpec((S, H), tile_idx),
            scratch_shapes=[
                pltpu.VMEM((2, S, H), embed_w.dtype),   # 2-slot gathered-rows buffer
                pltpu.SemaphoreType.DMA((2,)),          # one shared DMA sem per slot
            ],
        ),
        compiler_params=pltpu.CompilerParams(
            dimension_semantics=("parallel", "arbitrary"),
            vmem_limit_bytes=vmem_limit,
        ),
    )(*args)
    return out.reshape(B, S, H)


# ----------------------------------------------------------------------------
# Deterministic parameter construction (mirrors the PyTorch module __init__)
# ----------------------------------------------------------------------------

def sinusoidal_positional_embedding(max_len, hidden):
    pos = jnp.arange(max_len, dtype=jnp.float32)[:, None]
    div = jnp.exp(jnp.arange(0, hidden, 2, dtype=jnp.float32)
                  * (-math.log(10000.0) / hidden))
    pe = jnp.zeros((max_len, hidden), jnp.float32)
    pe = pe.at[:, 0::2].set(jnp.sin(pos * div))
    pe = pe.at[:, 1::2].set(jnp.cos(pos * div))
    return pe


# ----------------------------------------------------------------------------
# Demo / self-check
# ----------------------------------------------------------------------------

if __name__ == "__main__":
    B, S, V, H, MAX_LEN = 4, 8, 256, 128, 16
    DROPOUT = 0.1

    key = jax.random.PRNGKey(0)
    k_embed, k_tok, k_drop = jax.random.split(key, 3)
    embed_w = jax.random.normal(k_embed, (V, H), jnp.float32) * 0.02
    pe = sinusoidal_positional_embedding(MAX_LEN, H)
    tokens = jax.random.randint(k_tok, (B, S), 0, V, dtype=jnp.int32)

    ref = embed_w[tokens] + pe[:S][None, :, :]

    # --- eval mode: dropout is an identity; exact check against pure-JAX reference ---
    out_eval = jax.block_until_ready(
        bert_embedding(tokens, embed_w, pe, dropout_rate=DROPOUT, train=False))
    assert out_eval.shape == (B, S, H)
    assert jnp.allclose(out_eval, ref, atol=1e-6), \
        float(jnp.max(jnp.abs(out_eval - ref)))

    # --- train mode: inverted dropout; mask is reproducible from the same key ---
    out_train = jax.block_until_ready(
        bert_embedding(tokens, embed_w, pe, dropout_rate=DROPOUT, train=True,
                       rng=k_drop))
    u = jax.random.uniform(k_drop, (B * S, H), jnp.float32).reshape(B, S, H)
    expected = jnp.where(u >= DROPOUT, ref * jnp.float32(1.0 / (1.0 - DROPOUT)), 0.0)
    assert out_train.shape == (B, S, H)
    assert jnp.allclose(out_train, expected, atol=1e-6), \
        float(jnp.max(jnp.abs(out_train - expected)))
    frac_dropped = float(jnp.mean((u < DROPOUT).astype(jnp.float32)))
    assert 0.02 <= frac_dropped <= 0.30, frac_dropped

    print("KERNEL_OK")
</pallas_src>

<mosaic_0001>
module attributes {stable_mosaic.version = 11 : i64} {
  func.func @kernel(%arg0: i32, %arg1: i32, %arg2: memref<32xi32, #tpu.memory_space<smem>>, %arg3: memref<8x128xf32, #tpu.memory_space<vmem>>, %arg4: memref<256x128xf32, #tpu.memory_space<any>>, %arg5: memref<8x128xf32, #tpu.memory_space<vmem>>, %arg6: memref<2x8x128xf32, #tpu.memory_space<vmem>>, %arg7: memref<2x!tpu.dma_semaphore, #tpu.memory_space<semaphore_mem>>) attributes {dimension_semantics = [#tpu.dimension_semantics<parallel>, #tpu.dimension_semantics<arbitrary>], iteration_bounds = array<i64: 2, 2>, scalar_prefetch = 1 : i64, scratch_operands = 2 : i64, tpu.core_type = #tpu.core_type<tc>, window_params = [{pipeline_mode = #tpu.pipeline_mode<synchronous>, transform_indices = @transform_0, window_bounds = array<i64: 8, 128>}, {}, {transform_indices = @transform_2, window_bounds = array<i64: 8, 128>}]} {
    %c2_i32 = arith.constant 2 : i32
    %0 = arith.muli %arg0, %c2_i32 : i32
    %1 = arith.addi %0, %arg1 : i32
    %c2_i32_0 = arith.constant 2 : i32
    %c0_i32 = arith.constant 0 : i32
    %2 = arith.cmpi eq, %c2_i32_0, %c0_i32 : i32
    %c1_i32 = arith.constant 1 : i32
    %3 = arith.select %2, %c1_i32, %c2_i32_0 : i32
    %4 = arith.remsi %arg1, %3 : i32
    %c0_i32_1 = arith.constant 0 : i32
    %5 = arith.cmpi ne, %4, %c0_i32_1 : i32
    %c0_i32_2 = arith.constant 0 : i32
    %6 = arith.cmpi slt, %4, %c0_i32_2 : i32
    %c0_i32_3 = arith.constant 0 : i32
    %7 = arith.cmpi slt, %3, %c0_i32_3 : i32
    %8 = arith.xori %6, %7 : i1
    %9 = arith.andi %8, %5 : i1
    %10 = arith.addi %4, %3 : i32
    %11 = arith.select %9, %10, %4 : i32
    %c0_i32_4 = arith.constant 0 : i32
    %12 = arith.cmpi eq, %arg1, %c0_i32_4 : i32
    %13 = arith.extui %12 : i1 to i32
    %c0_i32_5 = arith.constant 0 : i32
    %14 = arith.cmpi ne, %13, %c0_i32_5 : i32
    scf.if %14 {
      %c3_i32_41 = arith.constant 3 : i32
      %65 = arith.minsi %1, %c3_i32_41 : i32
      %c8_i32 = arith.constant 8 : i32
      %66 = arith.muli %65, %c8_i32 : i32
      %c0_i32_42 = arith.constant 0 : i32
      %67 = arith.addi %66, %c0_i32_42 : i32
      %68 = arith.index_cast %67 : i32 to index
      %69 = memref.load %arg2[%68] : memref<32xi32, #tpu.memory_space<smem>>
      %c0_i32_43 = arith.constant 0 : i32
      %70 = tpu.memref_slice %arg4[%69, %c0_i32_43] : memref<256x128xf32, #tpu.memory_space<any>> -> memref<1x128xf32, #tpu.memory_space<any>>
      %c0_i32_44 = arith.constant 0 : i32
      %c0_i32_45 = arith.constant 0 : i32
      %71 = tpu.memref_slice %arg6[%11, %c0_i32_44, %c0_i32_45] : memref<2x8x128xf32, #tpu.memory_space<vmem>> -> memref<1x1x128xf32, #tpu.memory_space<vmem>>
      %72 = tpu.memref_squeeze %71 : memref<1x1x128xf32, #tpu.memory_space<vmem>> -> memref<1x128xf32, #tpu.memory_space<vmem>>
      %73 = tpu.memref_slice %arg7[%11] : memref<2x!tpu.dma_semaphore, #tpu.memory_space<semaphore_mem>> -> memref<1x!tpu.dma_semaphore, #tpu.memory_space<semaphore_mem>>
      %74 = tpu.memref_squeeze %73 : memref<1x!tpu.dma_semaphore, #tpu.memory_space<semaphore_mem>> -> memref<!tpu.dma_semaphore, #tpu.memory_space<semaphore_mem>>
      tpu.enqueue_dma source(%70 : memref<1x128xf32, #tpu.memory_space<any>>) target(%72 : memref<1x128xf32, #tpu.memory_space<vmem>>) target_semaphore(%74 : memref<!tpu.dma_semaphore, #tpu.memory_space<semaphore_mem>>)
      %c1_i32_46 = arith.constant 1 : i32
      %75 = arith.addi %66, %c1_i32_46 : i32
      %76 = arith.index_cast %75 : i32 to index
      %77 = memref.load %arg2[%76] : memref<32xi32, #tpu.memory_space<smem>>
      %c0_i32_47 = arith.constant 0 : i32
      %78 = tpu.memref_slice %arg4[%77, %c0_i32_47] : memref<256x128xf32, #tpu.memory_space<any>> -> memref<1x128xf32, #tpu.memory_space<any>>
      %c1_i32_48 = arith.constant 1 : i32
      %c0_i32_49 = arith.constant 0 : i32
      %79 = tpu.memref_slice %arg6[%11, %c1_i32_48, %c0_i32_49] : memref<2x8x128xf32, #tpu.memory_space<vmem>> -> memref<1x1x128xf32, #tpu.memory_space<vmem>>
      %80 = tpu.memref_squeeze %79 : memref<1x1x128xf32, #tpu.memory_space<vmem>> -> memref<1x128xf32, #tpu.memory_space<vmem>>
      %81 = tpu.memref_slice %arg7[%11] : memref<2x!tpu.dma_semaphore, #tpu.memory_space<semaphore_mem>> -> memref<1x!tpu.dma_semaphore, #tpu.memory_space<semaphore_mem>>
      %82 = tpu.memref_squeeze %81 : memref<1x!tpu.dma_semaphore, #tpu.memory_space<semaphore_mem>> -> memref<!tpu.dma_semaphore, #tpu.memory_space<semaphore_mem>>
      tpu.enqueue_dma source(%78 : memref<1x128xf32, #tpu.memory_space<any>>) target(%80 : memref<1x128xf32, #tpu.memory_space<vmem>>) target_semaphore(%82 : memref<!tpu.dma_semaphore, #tpu.memory_space<semaphore_mem>>)
      %c2_i32_50 = arith.constant 2 : i32
      %83 = arith.addi %66, %c2_i32_50 : i32
      %84 = arith.index_cast %83 : i32 to index
      %85 = memref.load %arg2[%84] : memref<32xi32, #tpu.memory_space<smem>>
      %c0_i32_51 = arith.constant 0 : i32
      %86 = tpu.memref_slice %arg4[%85, %c0_i32_51] : memref<256x128xf32, #tpu.memory_space<any>> -> memref<1x128xf32, #tpu.memory_space<any>>
      %c2_i32_52 = arith.constant 2 : i32
      %c0_i32_53 = arith.constant 0 : i32
      %87 = tpu.memref_slice %arg6[%11, %c2_i32_52, %c0_i32_53] : memref<2x8x128xf32, #tpu.memory_space<vmem>> -> memref<1x1x128xf32, #tpu.memory_space<vmem>>
      %88 = tpu.memref_squeeze %87 : memref<1x1x128xf32, #tpu.memory_space<vmem>> -> memref<1x128xf32, #tpu.memory_space<vmem>>
      %89 = tpu.memref_slice %arg7[%11] : memref<2x!tpu.dma_semaphore, #tpu.memory_space<semaphore_mem>> -> memref<1x!tpu.dma_semaphore, #tpu.memory_space<semaphore_mem>>
      %90 = tpu.memref_squeeze %89 : memref<1x!tpu.dma_semaphore, #tpu.memory_space<semaphore_mem>> -> memref<!tpu.dma_semaphore, #tpu.memory_space<semaphore_mem>>
      tpu.enqueue_dma source(%86 : memref<1x128xf32, #tpu.memory_space<any>>) target(%88 : memref<1x128xf32, #tpu.memory_space<vmem>>) target_semaphore(%90 : memref<!tpu.dma_semaphore, #tpu.memory_space<semaphore_mem>>)
      %c3_i32_54 = arith.constant 3 : i32
      %91 = arith.addi %66, %c3_i32_54 : i32
      %92 = arith.index_cast %91 : i32 to index
      %93 = memref.load %arg2[%92] : memref<32xi32, #tpu.memory_space<smem>>
      %c0_i32_55 = arith.constant 0 : i32
      %94 = tpu.memref_slice %arg4[%93, %c0_i32_55] : memref<256x128xf32, #tpu.memory_space<any>> -> memref<1x128xf32, #tpu.memory_space<any>>
      %c3_i32_56 = arith.constant 3 : i32
      %c0_i32_57 = arith.constant 0 : i32
      %95 = tpu.memref_slice %arg6[%11, %c3_i32_56, %c0_i32_57] : memref<2x8x128xf32, #tpu.memory_space<vmem>> -> memref<1x1x128xf32, #tpu.memory_space<vmem>>
      %96 = tpu.memref_squeeze %95 : memref<1x1x128xf32, #tpu.memory_space<vmem>> -> memref<1x128xf32, #tpu.memory_space<vmem>>
      %97 = tpu.memref_slice %arg7[%11] : memref<2x!tpu.dma_semaphore, #tpu.memory_space<semaphore_mem>> -> memref<1x!tpu.dma_semaphore, #tpu.memory_space<semaphore_mem>>
      %98 = tpu.memref_squeeze %97 : memref<1x!tpu.dma_semaphore, #tpu.memory_space<semaphore_mem>> -> memref<!tpu.dma_semaphore, #tpu.memory_space<semaphore_mem>>
      tpu.enqueue_dma source(%94 : memref<1x128xf32, #tpu.memory_space<any>>) target(%96 : memref<1x128xf32, #tpu.memory_space<vmem>>) target_semaphore(%98 : memref<!tpu.dma_semaphore, #tpu.memory_space<semaphore_mem>>)
      %c4_i32_58 = arith.constant 4 : i32
      %99 = arith.addi %66, %c4_i32_58 : i32
      %100 = arith.index_cast %99 : i32 to index
      %101 = memref.load %arg2[%100] : memref<32xi32, #tpu.memory_space<smem>>
      %c0_i32_59 = arith.constant 0 : i32
      %102 = tpu.memref_slice %arg4[%101, %c0_i32_59] : memref<256x128xf32, #tpu.memory_space<any>> -> memref<1x128xf32, #tpu.memory_space<any>>
      %c4_i32_60 = arith.constant 4 : i32
      %c0_i32_61 = arith.constant 0 : i32
      %103 = tpu.memref_slice %arg6[%11, %c4_i32_60, %c0_i32_61] : memref<2x8x128xf32, #tpu.memory_space<vmem>> -> memref<1x1x128xf32, #tpu.memory_space<vmem>>
      %104 = tpu.memref_squeeze %103 : memref<1x1x128xf32, #tpu.memory_space<vmem>> -> memref<1x128xf32, #tpu.memory_space<vmem>>
      %105 = tpu.memref_slice %arg7[%11] : memref<2x!tpu.dma_semaphore, #tpu.memory_space<semaphore_mem>> -> memref<1x!tpu.dma_semaphore, #tpu.memory_space<semaphore_mem>>
      %106 = tpu.memref_squeeze %105 : memref<1x!tpu.dma_semaphore, #tpu.memory_space<semaphore_mem>> -> memref<!tpu.dma_semaphore, #tpu.memory_space<semaphore_mem>>
      tpu.enqueue_dma source(%102 : memref<1x128xf32, #tpu.memory_space<any>>) target(%104 : memref<1x128xf32, #tpu.memory_space<vmem>>) target_semaphore(%106 : memref<!tpu.dma_semaphore, #tpu.memory_space<semaphore_mem>>)
      %c5_i32_62 = arith.constant 5 : i32
      %107 = arith.addi %66, %c5_i32_62 : i32
      %108 = arith.index_cast %107 : i32 to index
      %109 = memref.load %arg2[%108] : memref<32xi32, #tpu.memory_space<smem>>
      %c0_i32_63 = arith.constant 0 : i32
      %110 = tpu.memref_slice %arg4[%109, %c0_i32_63] : memref<256x128xf32, #tpu.memory_space<any>> -> memref<1x128xf32, #tpu.memory_space<any>>
      %c5_i32_64 = arith.constant 5 : i32
      %c0_i32_65 = arith.constant 0 : i32
      %111 = tpu.memref_slice %arg6[%11, %c5_i32_64, %c0_i32_65] : memref<2x8x128xf32, #tpu.memory_space<vmem>> -> memref<1x1x128xf32, #tpu.memory_space<vmem>>
      %112 = tpu.memref_squeeze %111 : memref<1x1x128xf32, #tpu.memory_space<vmem>> -> memref<1x128xf32, #tpu.memory_space<vmem>>
      %113 = tpu.memref_slice %arg7[%11] : memref<2x!tpu.dma_semaphore, #tpu.memory_space<semaphore_mem>> -> memref<1x!tpu.dma_semaphore, #tpu.memory_space<semaphore_mem>>
      %114 = tpu.memref_squeeze %113 : memref<1x!tpu.dma_semaphore, #tpu.memory_space<semaphore_mem>> -> memref<!tpu.dma_semaphore, #tpu.memory_space<semaphore_mem>>
      tpu.enqueue_dma source(%110 : memref<1x128xf32, #tpu.memory_space<any>>) target(%112 : memref<1x128xf32, #tpu.memory_space<vmem>>) target_semaphore(%114 : memref<!tpu.dma_semaphore, #tpu.memory_space<semaphore_mem>>)
      %c6_i32_66 = arith.constant 6 : i32
      %115 = arith.addi %66, %c6_i32_66 : i32
      %116 = arith.index_cast %115 : i32 to index
      %117 = memref.load %arg2[%116] : memref<32xi32, #tpu.memory_space<smem>>
      %c0_i32_67 = arith.constant 0 : i32
      %118 = tpu.memref_slice %arg4[%117, %c0_i32_67] : memref<256x128xf32, #tpu.memory_space<any>> -> memref<1x128xf32, #tpu.memory_space<any>>
      %c6_i32_68 = arith.constant 6 : i32
      %c0_i32_69 = arith.constant 0 : i32
      %119 = tpu.memref_slice %arg6[%11, %c6_i32_68, %c0_i32_69] : memref<2x8x128xf32, #tpu.memory_space<vmem>> -> memref<1x1x128xf32, #tpu.memory_space<vmem>>
      %120 = tpu.memref_squeeze %119 : memref<1x1x128xf32, #tpu.memory_space<vmem>> -> memref<1x128xf32, #tpu.memory_space<vmem>>
      %121 = tpu.memref_slice %arg7[%11] : memref<2x!tpu.dma_semaphore, #tpu.memory_space<semaphore_mem>> -> memref<1x!tpu.dma_semaphore, #tpu.memory_space<semaphore_mem>>
      %122 = tpu.memref_squeeze %121 : memref<1x!tpu.dma_semaphore, #tpu.memory_space<semaphore_mem>> -> memref<!tpu.dma_semaphore, #tpu.memory_space<semaphore_mem>>
      tpu.enqueue_dma source(%118 : memref<1x128xf32, #tpu.memory_space<any>>) target(%120 : memref<1x128xf32, #tpu.memory_space<vmem>>) target_semaphore(%122 : memref<!tpu.dma_semaphore, #tpu.memory_space<semaphore_mem>>)
      %c7_i32_70 = arith.constant 7 : i32
      %123 = arith.addi %66, %c7_i32_70 : i32
      %124 = arith.index_cast %123 : i32 to index
      %125 = memref.load %arg2[%124] : memref<32xi32, #tpu.memory_space<smem>>
      %c0_i32_71 = arith.constant 0 : i32
      %126 = tpu.memref_slice %arg4[%125, %c0_i32_71] : memref<256x128xf32, #tpu.memory_space<any>> -> memref<1x128xf32, #tpu.memory_space<any>>
      %c7_i32_72 = arith.constant 7 : i32
      %c0_i32_73 = arith.constant 0 : i32
      %127 = tpu.memref_slice %arg6[%11, %c7_i32_72, %c0_i32_73] : memref<2x8x128xf32, #tpu.memory_space<vmem>> -> memref<1x1x128xf32, #tpu.memory_space<vmem>>
      %128 = tpu.memref_squeeze %127 : memref<1x1x128xf32, #tpu.memory_space<vmem>> -> memref<1x128xf32, #tpu.memory_space<vmem>>
      %129 = tpu.memref_slice %arg7[%11] : memref<2x!tpu.dma_semaphore, #tpu.memory_space<semaphore_mem>> -> memref<1x!tpu.dma_semaphore, #tpu.memory_space<semaphore_mem>>
      %130 = tpu.memref_squeeze %129 : memref<1x!tpu.dma_semaphore, #tpu.memory_space<semaphore_mem>> -> memref<!tpu.dma_semaphore, #tpu.memory_space<semaphore_mem>>
      tpu.enqueue_dma source(%126 : memref<1x128xf32, #tpu.memory_space<any>>) target(%128 : memref<1x128xf32, #tpu.memory_space<vmem>>) target_semaphore(%130 : memref<!tpu.dma_semaphore, #tpu.memory_space<semaphore_mem>>)
    } else {
    }
    %c1_i32_6 = arith.constant 1 : i32
    %15 = arith.addi %arg1, %c1_i32_6 : i32
    %c2_i32_7 = arith.constant 2 : i32
    %16 = arith.cmpi slt, %15, %c2_i32_7 : i32
    %17 = arith.extui %16 : i1 to i32
    %c0_i32_8 = arith.constant 0 : i32
    %18 = arith.cmpi ne, %17, %c0_i32_8 : i32
    scf.if %18 {
      %c1_i32_41 = arith.constant 1 : i32
      %65 = arith.addi %1, %c1_i32_41 : i32
      %c1_i32_42 = arith.constant 1 : i32
      %66 = arith.subi %c1_i32_42, %11 : i32
      %c3_i32_43 = arith.constant 3 : i32
      %67 = arith.minsi %65, %c3_i32_43 : i32
      %c8_i32 = arith.constant 8 : i32
      %68 = arith.muli %67, %c8_i32 : i32
      %c0_i32_44 = arith.constant 0 : i32
      %69 = arith.addi %68, %c0_i32_44 : i32
      %70 = arith.index_cast %69 : i32 to index
      %71 = memref.load %arg2[%70] : memref<32xi32, #tpu.memory_space<smem>>
      %c0_i32_45 = arith.constant 0 : i32
      %72 = tpu.memref_slice %arg4[%71, %c0_i32_45] : memref<256x128xf32, #tpu.memory_space<any>> -> memref<1x128xf32, #tpu.memory_space<any>>
      %c0_i32_46 = arith.constant 0 : i32
      %c0_i32_47 = arith.constant 0 : i32
      %73 = tpu.memref_slice %arg6[%66, %c0_i32_46, %c0_i32_47] : memref<2x8x128xf32, #tpu.memory_space<vmem>> -> memref<1x1x128xf32, #tpu.memory_space<vmem>>
      %74 = tpu.memref_squeeze %73 : memref<1x1x128xf32, #tpu.memory_space<vmem>> -> memref<1x128xf32, #tpu.memory_space<vmem>>
      %75 = tpu.memref_slice %arg7[%66] : memref<2x!tpu.dma_semaphore, #tpu.memory_space<semaphore_mem>> -> memref<1x!tpu.dma_semaphore, #tpu.memory_space<semaphore_mem>>
      %76 = tpu.memref_squeeze %75 : memref<1x!tpu.dma_semaphore, #tpu.memory_space<semaphore_mem>> -> memref<!tpu.dma_semaphore, #tpu.memory_space<semaphore_mem>>
      tpu.enqueue_dma source(%72 : memref<1x128xf32, #tpu.memory_space<any>>) target(%74 : memref<1x128xf32, #tpu.memory_space<vmem>>) target_semaphore(%76 : memref<!tpu.dma_semaphore, #tpu.memory_space<semaphore_mem>>)
      %c1_i32_48 = arith.constant 1 : i32
      %77 = arith.addi %68, %c1_i32_48 : i32
      %78 = arith.index_cast %77 : i32 to index
      %79 = memref.load %arg2[%78] : memref<32xi32, #tpu.memory_space<smem>>
      %c0_i32_49 = arith.constant 0 : i32
      %80 = tpu.memref_slice %arg4[%79, %c0_i32_49] : memref<256x128xf32, #tpu.memory_space<any>> -> memref<1x128xf32, #tpu.memory_space<any>>
      %c1_i32_50 = arith.constant 1 : i32
      %c0_i32_51 = arith.constant 0 : i32
      %81 = tpu.memref_slice %arg6[%66, %c1_i32_50, %c0_i32_51] : memref<2x8x128xf32, #tpu.memory_space<vmem>> -> memref<1x1x128xf32, #tpu.memory_space<vmem>>
      %82 = tpu.memref_squeeze %81 : memref<1x1x128xf32, #tpu.memory_space<vmem>> -> memref<1x128xf32, #tpu.memory_space<vmem>>
      %83 = tpu.memref_slice %arg7[%66] : memref<2x!tpu.dma_semaphore, #tpu.memory_space<semaphore_mem>> -> memref<1x!tpu.dma_semaphore, #tpu.memory_space<semaphore_mem>>
      %84 = tpu.memref_squeeze %83 : memref<1x!tpu.dma_semaphore, #tpu.memory_space<semaphore_mem>> -> memref<!tpu.dma_semaphore, #tpu.memory_space<semaphore_mem>>
      tpu.enqueue_dma source(%80 : memref<1x128xf32, #tpu.memory_space<any>>) target(%82 : memref<1x128xf32, #tpu.memory_space<vmem>>) target_semaphore(%84 : memref<!tpu.dma_semaphore, #tpu.memory_space<semaphore_mem>>)
      %c2_i32_52 = arith.constant 2 : i32
      %85 = arith.addi %68, %c2_i32_52 : i32
      %86 = arith.index_cast %85 : i32 to index
      %87 = memref.load %arg2[%86] : memref<32xi32, #tpu.memory_space<smem>>
      %c0_i32_53 = arith.constant 0 : i32
      %88 = tpu.memref_slice %arg4[%87, %c0_i32_53] : memref<256x128xf32, #tpu.memory_space<any>> -> memref<1x128xf32, #tpu.memory_space<any>>
      %c2_i32_54 = arith.constant 2 : i32
      %c0_i32_55 = arith.constant 0 : i32
      %89 = tpu.memref_slice %arg6[%66, %c2_i32_54, %c0_i32_55] : memref<2x8x128xf32, #tpu.memory_space<vmem>> -> memref<1x1x128xf32, #tpu.memory_space<vmem>>
      %90 = tpu.memref_squeeze %89 : memref<1x1x128xf32, #tpu.memory_space<vmem>> -> memref<1x128xf32, #tpu.memory_space<vmem>>
      %91 = tpu.memref_slice %arg7[%66] : memref<2x!tpu.dma_semaphore, #tpu.memory_space<semaphore_mem>> -> memref<1x!tpu.dma_semaphore, #tpu.memory_space<semaphore_mem>>
      %92 = tpu.memref_squeeze %91 : memref<1x!tpu.dma_semaphore, #tpu.memory_space<semaphore_mem>> -> memref<!tpu.dma_semaphore, #tpu.memory_space<semaphore_mem>>
      tpu.enqueue_dma source(%88 : memref<1x128xf32, #tpu.memory_space<any>>) target(%90 : memref<1x128xf32, #tpu.memory_space<vmem>>) target_semaphore(%92 : memref<!tpu.dma_semaphore, #tpu.memory_space<semaphore_mem>>)
      %c3_i32_56 = arith.constant 3 : i32
      %93 = arith.addi %68, %c3_i32_56 : i32
      %94 = arith.index_cast %93 : i32 to index
      %95 = memref.load %arg2[%94] : memref<32xi32, #tpu.memory_space<smem>>
      %c0_i32_57 = arith.constant 0 : i32
      %96 = tpu.memref_slice %arg4[%95, %c0_i32_57] : memref<256x128xf32, #tpu.memory_space<any>> -> memref<1x128xf32, #tpu.memory_space<any>>
      %c3_i32_58 = arith.constant 3 : i32
      %c0_i32_59 = arith.constant 0 : i32
      %97 = tpu.memref_slice %arg6[%66, %c3_i32_58, %c0_i32_59] : memref<2x8x128xf32, #tpu.memory_space<vmem>> -> memref<1x1x128xf32, #tpu.memory_space<vmem>>
      %98 = tpu.memref_squeeze %97 : memref<1x1x128xf32, #tpu.memory_space<vmem>> -> memref<1x128xf32, #tpu.memory_space<vmem>>
      %99 = tpu.memref_slice %arg7[%66] : memref<2x!tpu.dma_semaphore, #tpu.memory_space<semaphore_mem>> -> memref<1x!tpu.dma_semaphore, #tpu.memory_space<semaphore_mem>>
      %100 = tpu.memref_squeeze %99 : memref<1x!tpu.dma_semaphore, #tpu.memory_space<semaphore_mem>> -> memref<!tpu.dma_semaphore, #tpu.memory_space<semaphore_mem>>
      tpu.enqueue_dma source(%96 : memref<1x128xf32, #tpu.memory_space<any>>) target(%98 : memref<1x128xf32, #tpu.memory_space<vmem>>) target_semaphore(%100 : memref<!tpu.dma_semaphore, #tpu.memory_space<semaphore_mem>>)
      %c4_i32_60 = arith.constant 4 : i32
      %101 = arith.addi %68, %c4_i32_60 : i32
      %102 = arith.index_cast %101 : i32 to index
      %103 = memref.load %arg2[%102] : memref<32xi32, #tpu.memory_space<smem>>
      %c0_i32_61 = arith.constant 0 : i32
      %104 = tpu.memref_slice %arg4[%103, %c0_i32_61] : memref<256x128xf32, #tpu.memory_space<any>> -> memref<1x128xf32, #tpu.memory_space<any>>
      %c4_i32_62 = arith.constant 4 : i32
      %c0_i32_63 = arith.constant 0 : i32
      %105 = tpu.memref_slice %arg6[%66, %c4_i32_62, %c0_i32_63] : memref<2x8x128xf32, #tpu.memory_space<vmem>> -> memref<1x1x128xf32, #tpu.memory_space<vmem>>
      %106 = tpu.memref_squeeze %105 : memref<1x1x128xf32, #tpu.memory_space<vmem>> -> memref<1x128xf32, #tpu.memory_space<vmem>>
      %107 = tpu.memref_slice %arg7[%66] : memref<2x!tpu.dma_semaphore, #tpu.memory_space<semaphore_mem>> -> memref<1x!tpu.dma_semaphore, #tpu.memory_space<semaphore_mem>>
      %108 = tpu.memref_squeeze %107 : memref<1x!tpu.dma_semaphore, #tpu.memory_space<semaphore_mem>> -> memref<!tpu.dma_semaphore, #tpu.memory_space<semaphore_mem>>
      tpu.enqueue_dma source(%104 : memref<1x128xf32, #tpu.memory_space<any>>) target(%106 : memref<1x128xf32, #tpu.memory_space<vmem>>) target_semaphore(%108 : memref<!tpu.dma_semaphore, #tpu.memory_space<semaphore_mem>>)
      %c5_i32_64 = arith.constant 5 : i32
      %109 = arith.addi %68, %c5_i32_64 : i32
      %110 = arith.index_cast %109 : i32 to index
      %111 = memref.load %arg2[%110] : memref<32xi32, #tpu.memory_space<smem>>
      %c0_i32_65 = arith.constant 0 : i32
      %112 = tpu.memref_slice %arg4[%111, %c0_i32_65] : memref<256x128xf32, #tpu.memory_space<any>> -> memref<1x128xf32, #tpu.memory_space<any>>
      %c5_i32_66 = arith.constant 5 : i32
      %c0_i32_67 = arith.constant 0 : i32
      %113 = tpu.memref_slice %arg6[%66, %c5_i32_66, %c0_i32_67] : memref<2x8x128xf32, #tpu.memory_space<vmem>> -> memref<1x1x128xf32, #tpu.memory_space<vmem>>
      %114 = tpu.memref_squeeze %113 : memref<1x1x128xf32, #tpu.memory_space<vmem>> -> memref<1x128xf32, #tpu.memory_space<vmem>>
      %115 = tpu.memref_slice %arg7[%66] : memref<2x!tpu.dma_semaphore, #tpu.memory_space<semaphore_mem>> -> memref<1x!tpu.dma_semaphore, #tpu.memory_space<semaphore_mem>>
      %116 = tpu.memref_squeeze %115 : memref<1x!tpu.dma_semaphore, #tpu.memory_space<semaphore_mem>> -> memref<!tpu.dma_semaphore, #tpu.memory_space<semaphore_mem>>
      tpu.enqueue_dma source(%112 : memref<1x128xf32, #tpu.memory_space<any>>) target(%114 : memref<1x128xf32, #tpu.memory_space<vmem>>) target_semaphore(%116 : memref<!tpu.dma_semaphore, #tpu.memory_space<semaphore_mem>>)
      %c6_i32_68 = arith.constant 6 : i32
      %117 = arith.addi %68, %c6_i32_68 : i32
      %118 = arith.index_cast %117 : i32 to index
      %119 = memref.load %arg2[%118] : memref<32xi32, #tpu.memory_space<smem>>
      %c0_i32_69 = arith.constant 0 : i32
      %120 = tpu.memref_slice %arg4[%119, %c0_i32_69] : memref<256x128xf32, #tpu.memory_space<any>> -> memref<1x128xf32, #tpu.memory_space<any>>
      %c6_i32_70 = arith.constant 6 : i32
      %c0_i32_71 = arith.constant 0 : i32
      %121 = tpu.memref_slice %arg6[%66, %c6_i32_70, %c0_i32_71] : memref<2x8x128xf32, #tpu.memory_space<vmem>> -> memref<1x1x128xf32, #tpu.memory_space<vmem>>
      %122 = tpu.memref_squeeze %121 : memref<1x1x128xf32, #tpu.memory_space<vmem>> -> memref<1x128xf32, #tpu.memory_space<vmem>>
      %123 = tpu.memref_slice %arg7[%66] : memref<2x!tpu.dma_semaphore, #tpu.memory_space<semaphore_mem>> -> memref<1x!tpu.dma_semaphore, #tpu.memory_space<semaphore_mem>>
      %124 = tpu.memref_squeeze %123 : memref<1x!tpu.dma_semaphore, #tpu.memory_space<semaphore_mem>> -> memref<!tpu.dma_semaphore, #tpu.memory_space<semaphore_mem>>
      tpu.enqueue_dma source(%120 : memref<1x128xf32, #tpu.memory_space<any>>) target(%122 : memref<1x128xf32, #tpu.memory_space<vmem>>) target_semaphore(%124 : memref<!tpu.dma_semaphore, #tpu.memory_space<semaphore_mem>>)
      %c7_i32_72 = arith.constant 7 : i32
      %125 = arith.addi %68, %c7_i32_72 : i32
      %126 = arith.index_cast %125 : i32 to index
      %127 = memref.load %arg2[%126] : memref<32xi32, #tpu.memory_space<smem>>
      %c0_i32_73 = arith.constant 0 : i32
      %128 = tpu.memref_slice %arg4[%127, %c0_i32_73] : memref<256x128xf32, #tpu.memory_space<any>> -> memref<1x128xf32, #tpu.memory_space<any>>
      %c7_i32_74 = arith.constant 7 : i32
      %c0_i32_75 = arith.constant 0 : i32
      %129 = tpu.memref_slice %arg6[%66, %c7_i32_74, %c0_i32_75] : memref<2x8x128xf32, #tpu.memory_space<vmem>> -> memref<1x1x128xf32, #tpu.memory_space<vmem>>
      %130 = tpu.memref_squeeze %129 : memref<1x1x128xf32, #tpu.memory_space<vmem>> -> memref<1x128xf32, #tpu.memory_space<vmem>>
      %131 = tpu.memref_slice %arg7[%66] : memref<2x!tpu.dma_semaphore, #tpu.memory_space<semaphore_mem>> -> memref<1x!tpu.dma_semaphore, #tpu.memory_space<semaphore_mem>>
      %132 = tpu.memref_squeeze %131 : memref<1x!tpu.dma_semaphore, #tpu.memory_space<semaphore_mem>> -> memref<!tpu.dma_semaphore, #tpu.memory_space<semaphore_mem>>
      tpu.enqueue_dma source(%128 : memref<1x128xf32, #tpu.memory_space<any>>) target(%130 : memref<1x128xf32, #tpu.memory_space<vmem>>) target_semaphore(%132 : memref<!tpu.dma_semaphore, #tpu.memory_space<semaphore_mem>>)
    } else {
    }
    %c0_i32_9 = arith.constant 0 : i32
    %c0_i32_10 = arith.constant 0 : i32
    %19 = tpu.memref_slice %arg4[%c0_i32_9, %c0_i32_10] : memref<256x128xf32, #tpu.memory_space<any>> -> memref<1x128xf32, #tpu.memory_space<any>>
    %c0_i32_11 = arith.constant 0 : i32
    %c0_i32_12 = arith.constant 0 : i32
    %20 = tpu.memref_slice %arg6[%11, %c0_i32_11, %c0_i32_12] : memref<2x8x128xf32, #tpu.memory_space<vmem>> -> memref<1x1x128xf32, #tpu.memory_space<vmem>>
    %21 = tpu.memref_squeeze %20 : memref<1x1x128xf32, #tpu.memory_space<vmem>> -> memref<1x128xf32, #tpu.memory_space<vmem>>
    %22 = tpu.memref_slice %arg7[%11] : memref<2x!tpu.dma_semaphore, #tpu.memory_space<semaphore_mem>> -> memref<1x!tpu.dma_semaphore, #tpu.memory_space<semaphore_mem>>
    %23 = tpu.memref_squeeze %22 : memref<1x!tpu.dma_semaphore, #tpu.memory_space<semaphore_mem>> -> memref<!tpu.dma_semaphore, #tpu.memory_space<semaphore_mem>>
    tpu.wait_dma2 semaphore(%23 : memref<!tpu.dma_semaphore, #tpu.memory_space<semaphore_mem>>) src(%19 : memref<1x128xf32, #tpu.memory_space<any>>) dst(%21 : memref<1x128xf32, #tpu.memory_space<vmem>>)
    %c0_i32_13 = arith.constant 0 : i32
    %c0_i32_14 = arith.constant 0 : i32
    %24 = tpu.memref_slice %arg4[%c0_i32_13, %c0_i32_14] : memref<256x128xf32, #tpu.memory_space<any>> -> memref<1x128xf32, #tpu.memory_space<any>>
    %c1_i32_15 = arith.constant 1 : i32
    %c0_i32_16 = arith.constant 0 : i32
    %25 = tpu.memref_slice %arg6[%11, %c1_i32_15, %c0_i32_16] : memref<2x8x128xf32, #tpu.memory_space<vmem>> -> memref<1x1x128xf32, #tpu.memory_space<vmem>>
    %26 = tpu.memref_squeeze %25 : memref<1x1x128xf32, #tpu.memory_space<vmem>> -> memref<1x128xf32, #tpu.memory_space<vmem>>
    %27 = tpu.memref_slice %arg7[%11] : memref<2x!tpu.dma_semaphore, #tpu.memory_space<semaphore_mem>> -> memref<1x!tpu.dma_semaphore, #tpu.memory_space<semaphore_mem>>
    %28 = tpu.memref_squeeze %27 : memref<1x!tpu.dma_semaphore, #tpu.memory_space<semaphore_mem>> -> memref<!tpu.dma_semaphore, #tpu.memory_space<semaphore_mem>>
    tpu.wait_dma2 semaphore(%28 : memref<!tpu.dma_semaphore, #tpu.memory_space<semaphore_mem>>) src(%24 : memref<1x128xf32, #tpu.memory_space<any>>) dst(%26 : memref<1x128xf32, #tpu.memory_space<vmem>>)
    %c0_i32_17 = arith.constant 0 : i32
    %c0_i32_18 = arith.constant 0 : i32
    %29 = tpu.memref_slice %arg4[%c0_i32_17, %c0_i32_18] : memref<256x128xf32, #tpu.memory_space<any>> -> memref<1x128xf32, #tpu.memory_space<any>>
    %c2_i32_19 = arith.constant 2 : i32
    %c0_i32_20 = arith.constant 0 : i32
    %30 = tpu.memref_slice %arg6[%11, %c2_i32_19, %c0_i32_20] : memref<2x8x128xf32, #tpu.memory_space<vmem>> -> memref<1x1x128xf32, #tpu.memory_space<vmem>>
    %31 = tpu.memref_squeeze %30 : memref<1x1x128xf32, #tpu.memory_space<vmem>> -> memref<1x128xf32, #tpu.memory_space<vmem>>
    %32 = tpu.memref_slice %arg7[%11] : memref<2x!tpu.dma_semaphore, #tpu.memory_space<semaphore_mem>> -> memref<1x!tpu.dma_semaphore, #tpu.memory_space<semaphore_mem>>
    %33 = tpu.memref_squeeze %32 : memref<1x!tpu.dma_semaphore, #tpu.memory_space<semaphore_mem>> -> memref<!tpu.dma_semaphore, #tpu.memory_space<semaphore_mem>>
    tpu.wait_dma2 semaphore(%33 : memref<!tpu.dma_semaphore, #tpu.memory_space<semaphore_mem>>) src(%29 : memref<1x128xf32, #tpu.memory_space<any>>) dst(%31 : memref<1x128xf32, #tpu.memory_space<vmem>>)
    %c0_i32_21 = arith.constant 0 : i32
    %c0_i32_22 = arith.constant 0 : i32
    %34 = tpu.memref_slice %arg4[%c0_i32_21, %c0_i32_22] : memref<256x128xf32, #tpu.memory_space<any>> -> memref<1x128xf32, #tpu.memory_space<any>>
    %c3_i32 = arith.constant 3 : i32
    %c0_i32_23 = arith.constant 0 : i32
    %35 = tpu.memref_slice %arg6[%11, %c3_i32, %c0_i32_23] : memref<2x8x128xf32, #tpu.memory_space<vmem>> -> memref<1x1x128xf32, #tpu.memory_space<vmem>>
    %36 = tpu.memref_squeeze %35 : memref<1x1x128xf32, #tpu.memory_space<vmem>> -> memref<1x128xf32, #tpu.memory_space<vmem>>
    %37 = tpu.memref_slice %arg7[%11] : memref<2x!tpu.dma_semaphore, #tpu.memory_space<semaphore_mem>> -> memref<1x!tpu.dma_semaphore, #tpu.memory_space<semaphore_mem>>
    %38 = tpu.memref_squeeze %37 : memref<1x!tpu.dma_semaphore, #tpu.memory_space<semaphore_mem>> -> memref<!tpu.dma_semaphore, #tpu.memory_space<semaphore_mem>>
    tpu.wait_dma2 semaphore(%38 : memref<!tpu.dma_semaphore, #tpu.memory_space<semaphore_mem>>) src(%34 : memref<1x128xf32, #tpu.memory_space<any>>) dst(%36 : memref<1x128xf32, #tpu.memory_space<vmem>>)
    %c0_i32_24 = arith.constant 0 : i32
    %c0_i32_25 = arith.constant 0 : i32
    %39 = tpu.memref_slice %arg4[%c0_i32_24, %c0_i32_25] : memref<256x128xf32, #tpu.memory_space<any>> -> memref<1x128xf32, #tpu.memory_space<any>>
    %c4_i32 = arith.constant 4 : i32
    %c0_i32_26 = arith.constant 0 : i32
    %40 = tpu.memref_slice %arg6[%11, %c4_i32, %c0_i32_26] : memref<2x8x128xf32, #tpu.memory_space<vmem>> -> memref<1x1x128xf32, #tpu.memory_space<vmem>>
    %41 = tpu.memref_squeeze %40 : memref<1x1x128xf32, #tpu.memory_space<vmem>> -> memref<1x128xf32, #tpu.memory_space<vmem>>
    %42 = tpu.memref_slice %arg7[%11] : memref<2x!tpu.dma_semaphore, #tpu.memory_space<semaphore_mem>> -> memref<1x!tpu.dma_semaphore, #tpu.memory_space<semaphore_mem>>
    %43 = tpu.memref_squeeze %42 : memref<1x!tpu.dma_semaphore, #tpu.memory_space<semaphore_mem>> -> memref<!tpu.dma_semaphore, #tpu.memory_space<semaphore_mem>>
    tpu.wait_dma2 semaphore(%43 : memref<!tpu.dma_semaphore, #tpu.memory_space<semaphore_mem>>) src(%39 : memref<1x128xf32, #tpu.memory_space<any>>) dst(%41 : memref<1x128xf32, #tpu.memory_space<vmem>>)
    %c0_i32_27 = arith.constant 0 : i32
    %c0_i32_28 = arith.constant 0 : i32
    %44 = tpu.memref_slice %arg4[%c0_i32_27, %c0_i32_28] : memref<256x128xf32, #tpu.memory_space<any>> -> memref<1x128xf32, #tpu.memory_space<any>>
    %c5_i32 = arith.constant 5 : i32
    %c0_i32_29 = arith.constant 0 : i32
    %45 = tpu.memref_slice %arg6[%11, %c5_i32, %c0_i32_29] : memref<2x8x128xf32, #tpu.memory_space<vmem>> -> memref<1x1x128xf32, #tpu.memory_space<vmem>>
    %46 = tpu.memref_squeeze %45 : memref<1x1x128xf32, #tpu.memory_space<vmem>> -> memref<1x128xf32, #tpu.memory_space<vmem>>
    %47 = tpu.memref_slice %arg7[%11] : memref<2x!tpu.dma_semaphore, #tpu.memory_space<semaphore_mem>> -> memref<1x!tpu.dma_semaphore, #tpu.memory_space<semaphore_mem>>
    %48 = tpu.memref_squeeze %47 : memref<1x!tpu.dma_semaphore, #tpu.memory_space<semaphore_mem>> -> memref<!tpu.dma_semaphore, #tpu.memory_space<semaphore_mem>>
    tpu.wait_dma2 semaphore(%48 : memref<!tpu.dma_semaphore, #tpu.memory_space<semaphore_mem>>) src(%44 : memref<1x128xf32, #tpu.memory_space<any>>) dst(%46 : memref<1x128xf32, #tpu.memory_space<vmem>>)
    %c0_i32_30 = arith.constant 0 : i32
    %c0_i32_31 = arith.constant 0 : i32
    %49 = tpu.memref_slice %arg4[%c0_i32_30, %c0_i32_31] : memref<256x128xf32, #tpu.memory_space<any>> -> memref<1x128xf32, #tpu.memory_space<any>>
    %c6_i32 = arith.constant 6 : i32
    %c0_i32_32 = arith.constant 0 : i32
    %50 = tpu.memref_slice %arg6[%11, %c6_i32, %c0_i32_32] : memref<2x8x128xf32, #tpu.memory_space<vmem>> -> memref<1x1x128xf32, #tpu.memory_space<vmem>>
    %51 = tpu.memref_squeeze %50 : memref<1x1x128xf32, #tpu.memory_space<vmem>> -> memref<1x128xf32, #tpu.memory_space<vmem>>
    %52 = tpu.memref_slice %arg7[%11] : memref<2x!tpu.dma_semaphore, #tpu.memory_space<semaphore_mem>> -> memref<1x!tpu.dma_semaphore, #tpu.memory_space<semaphore_mem>>
    %53 = tpu.memref_squeeze %52 : memref<1x!tpu.dma_semaphore, #tpu.memory_space<semaphore_mem>> -> memref<!tpu.dma_semaphore, #tpu.memory_space<semaphore_mem>>
    tpu.wait_dma2 semaphore(%53 : memref<!tpu.dma_semaphore, #tpu.memory_space<semaphore_mem>>) src(%49 : memref<1x128xf32, #tpu.memory_space<any>>) dst(%51 : memref<1x128xf32, #tpu.memory_space<vmem>>)
    %c0_i32_33 = arith.constant 0 : i32
    %c0_i32_34 = arith.constant 0 : i32
    %54 = tpu.memref_slice %arg4[%c0_i32_33, %c0_i32_34] : memref<256x128xf32, #tpu.memory_space<any>> -> memref<1x128xf32, #tpu.memory_space<any>>
    %c7_i32 = arith.constant 7 : i32
    %c0_i32_35 = arith.constant 0 : i32
    %55 = tpu.memref_slice %arg6[%11, %c7_i32, %c0_i32_35] : memref<2x8x128xf32, #tpu.memory_space<vmem>> -> memref<1x1x128xf32, #tpu.memory_space<vmem>>
    %56 = tpu.memref_squeeze %55 : memref<1x1x128xf32, #tpu.memory_space<vmem>> -> memref<1x128xf32, #tpu.memory_space<vmem>>
    %57 = tpu.memref_slice %arg7[%11] : memref<2x!tpu.dma_semaphore, #tpu.memory_space<semaphore_mem>> -> memref<1x!tpu.dma_semaphore, #tpu.memory_space<semaphore_mem>>
    %58 = tpu.memref_squeeze %57 : memref<1x!tpu.dma_semaphore, #tpu.memory_space<semaphore_mem>> -> memref<!tpu.dma_semaphore, #tpu.memory_space<semaphore_mem>>
    tpu.wait_dma2 semaphore(%58 : memref<!tpu.dma_semaphore, #tpu.memory_space<semaphore_mem>>) src(%54 : memref<1x128xf32, #tpu.memory_space<any>>) dst(%56 : memref<1x128xf32, #tpu.memory_space<vmem>>)
    %59 = arith.index_cast %11 : i32 to index
    %c0 = arith.constant 0 : index
    %c0_36 = arith.constant 0 : index
    %60 = vector.load %arg6[%59, %c0, %c0_36] : memref<2x8x128xf32, #tpu.memory_space<vmem>>, vector<1x8x128xf32>
    %61 = vector.shape_cast %60 : vector<1x8x128xf32> to vector<8x128xf32>
    %c0_37 = arith.constant 0 : index
    %c0_38 = arith.constant 0 : index
    %62 = vector.load %arg3[%c0_37, %c0_38] : memref<8x128xf32, #tpu.memory_space<vmem>>, vector<8x128xf32>
    %63 = arith.addf %61, %62 : vector<8x128xf32>
    %c0_39 = arith.constant 0 : index
    %c0_40 = arith.constant 0 : index
    %64 = vector.load %arg5[%c0_39, %c0_40] : memref<8x128xf32, #tpu.memory_space<vmem>>, vector<8x128xf32>
    tpu.vector_store %arg5[%c0_39, %c0_40], %63 {strides = array<i32>} : memref<8x128xf32, #tpu.memory_space<vmem>>, vector<8x128xf32>,
    return
  }
  func.func @transform_0(%arg0: i32, %arg1: i32, %arg2: memref<32xi32, #tpu.memory_space<smem>>) -> (i32, i32) {
    %c0_i32 = arith.constant 0 : i32
    %c0_i32_0 = arith.constant 0 : i32
    %c0_i32_1 = arith.constant 0 : i32
    return %c0_i32, %c0_i32_0 : i32, i32
  }
  func.func @transform_2(%arg0: i32, %arg1: i32, %arg2: memref<32xi32, #tpu.memory_space<smem>>) -> (i32, i32) {
    %c2_i32 = arith.constant 2 : i32
    %0 = arith.muli %arg0, %c2_i32 : i32
    %1 = arith.addi %0, %arg1 : i32
    %c0_i32 = arith.constant 0 : i32
    %c0_i32_0 = arith.constant 0 : i32
    return %1, %c0_i32 : i32, i32
  }
}

</mosaic_0001>

<llo_original>
// kernel: tpu_custom_call.1
$region0: #{tpu_custom_call.1}
  #allocation0 [shape = 'u32[]', space=smem, size = 0x4, offset = 0x4, fixed_abs, tag = 'smem constant byte address 0x4 - core index']
  #allocation1 [shape = 'u32[72,128]{1,0:T(1,128)}', space=vmem, size = 0x9000, scoped, tag = 'internal scratch']
  #allocation2 [shape = 'f32[2,8,128]{2,1,0:T(8,128)}', space=vmem, size = 0x2000, scoped, tag = 'scratch operand']
  #allocation3 [shape = 's32[2]{0}', space=sflag, size = 0x8, scoped, tag = 'scratch operand']
  #allocation4 [shape = 's32[1]{0}', space=sflag, size = 0x4, scoped, tag = 'scoped memory for tpu_custom_call.1']
  #allocation5 [shape = 'u8[512]{0}', space=smem, size = 0x200, scoped, tag = 'prefetched SMEM operand 0']
  #allocation10 [shape = 's32[]', space=sflag, size = 0x4, offset = 0, fixed_abs, tag = 'sflag constant byte address 0x0 - dummy sync flag']
  #allocation11 [shape = 's32[]', space=sflag, size = 0x4, offset = 0, fixed_abs, tag = 'sflag constant byte address 0x0 - dummy sync flag']
  #allocation12 [shape = 'u32[]', space=smem, size = 0x4, offset = 0x44, fixed_abs, tag = 'smem constant byte address 0x44 - assertion arg 0']
  #allocation13 [shape = 'u32[]', space=smem, size = 0x4, offset = 0x48, fixed_abs, tag = 'smem constant byte address 0x48 - assertion arg 1']
  #allocation14 [shape = 's32[]', space=sflag, size = 0x4, offset = 0, fixed_abs, tag = 'sflag constant byte address 0x0 - dummy sync flag']
  #allocation15 [shape = 's32[]', space=sflag, size = 0x4, offset = 0, fixed_abs, tag = 'sflag constant byte address 0x0 - dummy sync flag']
  #allocation16 [shape = 's32[]', space=sflag, size = 0x4, offset = 0, fixed_abs, tag = 'sflag constant byte address 0x0 - dummy sync flag']
  #allocation17 [shape = 's32[]', space=sflag, size = 0x4, offset = 0, fixed_abs, tag = 'sflag constant byte address 0x0 - dummy sync flag']
  #allocation18 [shape = 's32[]', space=sflag, size = 0x4, offset = 0, fixed_abs, tag = 'sflag constant byte address 0x0 - dummy sync flag']
  #allocation19 [shape = 's32[]', space=sflag, size = 0x4, offset = 0, fixed_abs, tag = 'sflag constant byte address 0x0 - dummy sync flag']
  #allocation20 [shape = 's32[]', space=sflag, size = 0x4, offset = 0, fixed_abs, tag = 'sflag constant byte address 0x0 - dummy sync flag']
  #allocation21 [shape = 's32[]', space=sflag, size = 0x4, offset = 0, fixed_abs, tag = 'sflag constant byte address 0x0 - dummy sync flag']
  #allocation22 [shape = 's32[]', space=sflag, size = 0x4, offset = 0, fixed_abs, tag = 'sflag constant byte address 0x0 - dummy sync flag']
  #allocation23 [shape = 's32[]', space=sflag, size = 0x4, offset = 0, fixed_abs, tag = 'sflag constant byte address 0x0 - dummy sync flag']
  #allocation24 [shape = 's32[]', space=sflag, size = 0x4, offset = 0, fixed_abs, tag = 'sflag constant byte address 0x0 - dummy sync flag']
  #allocation25 [shape = 's32[]', space=sflag, size = 0x4, offset = 0, fixed_abs, tag = 'sflag constant byte address 0x0 - dummy sync flag']
  #allocation26 [shape = 's32[]', space=sflag, size = 0x4, offset = 0, fixed_abs, tag = 'sflag constant byte address 0x0 - dummy sync flag']
  #allocation27 [shape = 's32[]', space=sflag, size = 0x4, offset = 0, fixed_abs, tag = 'sflag constant byte address 0x0 - dummy sync flag']
  #allocation28 [shape = 's32[]', space=sflag, size = 0x4, offset = 0, fixed_abs, tag = 'sflag constant byte address 0x0 - dummy sync flag']
  #allocation29 [shape = 's32[]', space=sflag, size = 0x4, offset = 0, fixed_abs, tag = 'sflag constant byte address 0x0 - dummy sync flag']
  #allocation30 [shape = 's32[]', space=sflag, size = 0x4, offset = 0, fixed_abs, tag = 'sflag constant byte address 0x0 - dummy sync flag']
  #allocation31 [shape = 's32[]', space=sflag, size = 0x4, offset = 0, fixed_abs, tag = 'sflag constant byte address 0x0 - dummy sync flag']
  #allocation32 [shape = 's32[]', space=sflag, size = 0x4, offset = 0, fixed_abs, tag = 'sflag constant byte address 0x0 - dummy sync flag']
  #allocation33 [shape = 's32[]', space=sflag, size = 0x4, offset = 0, fixed_abs, tag = 'sflag constant byte address 0x0 - dummy sync flag']
  #allocation34 [shape = 's32[]', space=sflag, size = 0x4, offset = 0, fixed_abs, tag = 'sflag constant byte address 0x0 - dummy sync flag']
  #allocation35 [shape = 's32[]', space=sflag, size = 0x4, offset = 0, fixed_abs, tag = 'sflag constant byte address 0x0 - dummy sync flag']
  #allocation36 [shape = 's32[]', space=sflag, size = 0x4, offset = 0, fixed_abs, tag = 'sflag constant byte address 0x0 - dummy sync flag']
  #allocation37 [shape = 's32[]', space=sflag, size = 0x4, offset = 0, fixed_abs, tag = 'sflag constant byte address 0x0 - dummy sync flag']
  #allocation38 [shape = 's32[]', space=sflag, size = 0x4, offset = 0, fixed_abs, tag = 'sflag constant byte address 0x0 - dummy sync flag']
  #allocation39 [shape = 's32[]', space=sflag, size = 0x4, offset = 0, fixed_abs, tag = 'sflag constant byte address 0x0 - dummy sync flag']
  #allocation40 [shape = 's32[]', space=sflag, size = 0x4, offset = 0, fixed_abs, tag = 'sflag constant byte address 0x0 - dummy sync flag']
  #allocation41 [shape = 's32[]', space=sflag, size = 0x4, offset = 0, fixed_abs, tag = 'sflag constant byte address 0x0 - dummy sync flag']
  #allocation42 [shape = 's32[]', space=sflag, size = 0x4, offset = 0, fixed_abs, tag = 'sflag constant byte address 0x0 - dummy sync flag']
  #allocation43 [shape = 's32[]', space=sflag, size = 0x4, offset = 0, fixed_abs, tag = 'sflag constant byte address 0x0 - dummy sync flag']
  %s0 = inlined_call_operand.hbm [shape: s32[32], index: 0, kind: input, shape index: {}]
  %s1 = inlined_call_operand.hbm [shape: f32[8,128], index: 1, kind: input, shape index: {}]
  %s2 = inlined_call_operand.hbm [shape: f32[256,128], index: 2, kind: input, shape index: {}]
  %s3 = inlined_call_operand.hbm [shape: f32[32,128], index: 3, kind: output, shape index: {}]
  %s4 = sld [smem:[#allocation0]]
  $region113: #{tpu_custom_call.1} parent=0
    _
  %s6 = ssub.s32 1, %s4
  %s7 = scalar_select 0, %s6, %s4
  %s9 = sshll.u32 %s0, 4
  %s10 = int_to_ptr.hbm [resolvable:$true] %s9
  %12 = dma.hbm_to_smem %s10, 16, [#allocation5], [#allocation4]
  %14 = dma.done [#allocation4], 16
  %15 = sfence
  $region1: #{tpu_custom_call.1} parent=0
    #allocation6 [shape = 'u8[4096]{0}', space=vmem, size = 0x1000, scoped, tag = 'input window, operand 1, single buffered']
    #allocation7 [shape = 's32[2]{0}', space=sflag, size = 0x8, scoped, tag = 'scoped memory for tpu_custom_call.1']
    #allocation8 [shape = 's32[2]{0}', space=sflag, size = 0x8, scoped, tag = 'scoped memory for tpu_custom_call.1']
    #allocation9 [shape = 'u8[8192]{0}', space=vmem, size = 0x2000, scoped, tag = 'output window, operand 0']
    %16 = vsyncpa [#allocation7], 0
    %17 = vsyncpa [#allocation8], 0
    %s18 = scalar_lea.sflag [#allocation8], 1
    %19 = vsyncpa %s18, 0
    loop: start=0, step=1, limit=6
    $region2: #{tpu_custom_call.1} parent=1 // loop_pre_header
      _
    $region3: #{tpu_custom_call.1} parent=1 // loop_header
      %s21 = sphi 0, %s25
      %p22 = scmp.ge.s32.totalorder %s21, 6
      %s28 = sphi 0, %s40
      %s29 = sphi 0, %s36
      %s30 = sphi 0, %s28
      %s31 = sphi 0, %s29
      %s32 = sphi 0, %s30
      %s33 = sphi 0, %s31
      %s41 = sphi 0, %s41
      %s43 = sphi 0, %s41
      %s44 = sphi 0, %s43
      %s58 = sphi 0, %s44
      %s68 = sphi 0, %s70
      %s71 = sphi 0, %s68
      %s72 = sphi 0, %s71
      %s88 = sphi 0, %s72
    $region4: #{tpu_custom_call.1} parent=1 // loop_header_branch
      %24 = sbr.rel (%p22) target = $region8
    $region5: #{tpu_custom_call.1} parent=1 // loop_body
      %s26 = ssub.s32 %s21, 1
      %s27 = ssub.s32 %s21, 2
      %s34 = sadd.s32 1, %s29
      %p35 = scmp.ge.s32.totalorder %s34, 2
      %s36 = scalar_select %p35, 0, %s34
      %s37 = sadd.s32 1, %s28
      %s38 = scalar_select %p35, %s37, %s28
      %p39 = scmp.ge.s32.totalorder %s38, 2
      %s40 = scalar_select %p39, 0, %s38
      %s42 = sadd.s32 %s41, 1
      %p45 = scmp.eq.s32.totalorder %s21, 3
      %p46 = scmp.ne.s32.totalorder %s41, %s43
      %p47 = scmp.eq.s32.totalorder %s21, 0
      %p48 = por %p46, %p47
      %p49 = scmp.ne.s32.totalorder %s41, %s43
      %p50 = scmp.eq.s32.totalorder %s26, 3
      %p51 = por %p49, %p50
      %p52 = scmp.ne.s32.totalorder %s43, %s44
      %p53 = scmp.eq.s32.totalorder %s26, 0
      %p54 = por %p52, %p53
      %p55 = scmp.ne.s32.totalorder %s43, %s44
      %p56 = scmp.eq.s32.totalorder %s27, 3
      %p57 = por %p55, %p56
      %p59 = scmp.ne.s32.totalorder %s44, %s58
      %p60 = scmp.eq.s32.totalorder %s27, 0
      %p61 = por %p59, %p60
      %s62 = smul.u32 %s28, 2
      %s63 = sadd.s32 %s62, %s29
      %s64 = smul.u32 %s40, 2
      %s65 = sadd.s32 %s64, %s36
      %s66 = ssub.s32 %s63, %s65
      %p67 = scmp.eq.s32.totalorder %s66, 0
      %s69 = sadd.s32 %s68, 1
      %s70 = scalar_select %p67, %s68, %s69
      %p73 = pneg %p67
      %p74 = scmp.eq.s32.totalorder %s21, 3
      %p75 = por %p73, %p74
      %p76 = scmp.ne.s32.totalorder %s68, %s71
      %p77 = scmp.eq.s32.totalorder %s21, 0
      %p78 = por %p76, %p77
      %p79 = scmp.ne.s32.totalorder %s68, %s71
      %p80 = scmp.eq.s32.totalorder %s26, 3
      %p81 = por %p79, %p80
      %p82 = scmp.ne.s32.totalorder %s71, %s72
      %p83 = scmp.eq.s32.totalorder %s26, 0
      %p84 = por %p82, %p83
      %p85 = scmp.ne.s32.totalorder %s71, %s72
      %p86 = scmp.eq.s32.totalorder %s27, 3
      %p87 = por %p85, %p86
      %p89 = scmp.ne.s32.totalorder %s72, %s88
      %p90 = scmp.eq.s32.totalorder %s27, 0
      %p91 = por %p89, %p90
      %p92 = scmp.le.s32.totalorder 1, %s21
      %p93 = scmp.lt.s32.totalorder %s21, 5
      %p94 = pnand %p92, %p93
      %p95 = pneg %p94
      // Predicated region
      $region9: #{tpu_custom_call.1} parent=5 // pred_check
        _
      $region10: #{tpu_custom_call.1} parent=5 // pred_check_branch
        %97 = sbr.rel (%p94) target = $region12
      $region11: #{tpu_custom_call.1} parent=5 // pred_region
        %s98 = ssub.s32 %s21, 1
        // Predicated region
        $region13: #{tpu_custom_call.1} parent=11 // pred_check
          %p99 = pneg %p54
        $region14: #{tpu_custom_call.1} parent=11 // pred_check_branch
          %101 = sbr.rel (%p99) target = $region16
        $region15: #{tpu_custom_call.1} parent=11 // pred_region
          %103 = vsyncadd [#allocation7], 0
          %s105 = sshll.u32 %s1, 4
          %s106 = int_to_ptr.hbm [resolvable:$true] %s105
          %s107 = sshll.u32 [#allocation6], 4
          %s108 = int_to_ptr.vmem [resolvable:$true] %s107
          %110 = dma.hbm_to_vmem [thread:$0]  %s106, 128, %s108, [#allocation7]
        $region16: #{tpu_custom_call.1} parent=11 // pred_fallthru
          _
      $region12: #{tpu_custom_call.1} parent=5 // pred_fallthru
        _
      %p111 = scmp.lt.s32.totalorder %s21, 4
      // Predicated region
      $region17: #{tpu_custom_call.1} parent=5 // pred_check
        %p112 = pneg %p111
      $region18: #{tpu_custom_call.1} parent=5 // pred_check_branch
        %114 = sbr.rel (%p112) target = $region20
      $region19: #{tpu_custom_call.1} parent=5 // pred_region
        _
      $region20: #{tpu_custom_call.1} parent=5 // pred_fallthru
        _
      %p115 = scmp.le.s32.totalorder 1, %s21
      %p116 = scmp.lt.s32.totalorder %s21, 5
      %p117 = pnand %p115, %p116
      %p118 = pneg %p117
      // Predicated region
      $region21: #{tpu_custom_call.1} parent=5 // pred_check
        _
      $region22: #{tpu_custom_call.1} parent=5 // pred_check_branch
        %120 = sbr.rel (%p117) target = $region24
      $region23: #{tpu_custom_call.1} parent=5 // pred_region
        %s121 = ssub.s32 %s21, 1
        // Predicated region
        $region25: #{tpu_custom_call.1} parent=23 // pred_check
          %p122 = pneg %p54
        $region26: #{tpu_custom_call.1} parent=23 // pred_check_branch
          %124 = sbr.rel (%p122) target = $region28
        $region27: #{tpu_custom_call.1} parent=23 // pred_region
          %126 = dma.done [#allocation7], 128
        $region28: #{tpu_custom_call.1} parent=23 // pred_fallthru
          _
        %p127 = pneg %p54
        %p128 = pneg %p51
        %p129 = pneg %p84
        %p130 = pneg %p81
        %s131 = sand.u32 %s71, 1
        %s132 = scalar_lea.sflag [#allocation8], %s131
        %s133 = sand.u32 %s71, 1
        %s134 = smul.addr %s133, 8
        %s135 = scalar_lea.vmem [#allocation9], %s134
        %s136 = smul.u32 %s30, 2
        %s137 = sadd.s32 %s136, %s31
        %s138 = smul.u32 %s30, 2
        %s139 = sadd.s32 %s138, %s31
        %p140 = scmp.lt.s32.totalorder %s31, 0
        %s141 = ssub.s32 0, %s31
        %s142 = scalar_select %p140, %s141, %s31
        %s143 = sand.u32 %s142, 1
        %s144 = ssub.s32 0, %s143
        %s145 = scalar_select %p140, %s144, %s143
        %p146 = scmp.ne.s32.totalorder %s145, 0
        %p147 = scmp.lt.s32.totalorder %s145, 0
        %p148 = pnand %p147, %p146
        %p149 = pneg %p148
        %s150 = sadd.s32 %s145, 2
        %s151 = scalar_select %p149, %s150, %s145
        %p152 = scmp.eq.s32.totalorder %s31, 0
        // Predicated region
        $region29: #{tpu_custom_call.1} parent=23 // pred_check
          %p153 = pneg %p152
        $region30: #{tpu_custom_call.1} parent=23 // pred_check_branch
          %155 = sbr.rel (%p153) target = $region32
        $region31: #{tpu_custom_call.1} parent=23 // pred_region
          %p156 = scmp.lt.s32.totalorder %s139, 3
          %s157 = scalar_select %p156, %s139, 3
          %s158 = smul.u32 %s157, 8
          %s159 = sld [smem:[#allocation5 + %s158]]
          %s160 = scalar_lea.hbm %s2, %s159
          %s161 = smul.u32 %s151, 8
          %s162 = scalar_lea.vmem [#allocation2], %s161
          %s163 = scalar_lea.sflag [#allocation3], %s151
          // Predicated region
          $region33: #{tpu_custom_call.1} parent=31 // pred_check
            _
          $region34: #{tpu_custom_call.1} parent=31 // pred_check_branch
            %165 = sbr.rel target = $region36
          $region35: #{tpu_custom_call.1} parent=31 // pred_region
            %166 = sst [smem:[#allocation12]] [#allocation11]
            %167 = sst [smem:[#allocation13]] [#allocation10]
          $region36: #{tpu_custom_call.1} parent=31 // pred_fallthru
            _
          %169 = shalt.err (0)
          %s171 = sshll.u32 %s160, 4
          %s172 = int_to_ptr.hbm [resolvable:$true] %s171
          %s173 = sshll.u32 %s162, 4
          %s174 = int_to_ptr.vmem [resolvable:$true] %s173
          %176 = dma.hbm_to_vmem [thread:$0]  %s172, 16, %s174, %s163
          %s177 = sadd.s32 %s158, 1
          %s178 = sld [smem:[#allocation5 + %s177]]
          %s179 = scalar_lea.hbm %s2, %s178
          %s180 = sadd.s32 1, %s161
          %s181 = scalar_lea.vmem [#allocation2], %s180
          // Predicated region
          $region37: #{tpu_custom_call.1} parent=31 // pred_check
            _
          $region38: #{tpu_custom_call.1} parent=31 // pred_check_branch
            %183 = sbr.rel target = $region40
          $region39: #{tpu_custom_call.1} parent=31 // pred_region
            %184 = sst [smem:[#allocation12]] [#allocation15]
            %185 = sst [smem:[#allocation13]] [#allocation14]
          $region40: #{tpu_custom_call.1} parent=31 // pred_fallthru
            _
          %187 = shalt.err (0)
          %s189 = sshll.u32 %s179, 4
          %s190 = int_to_ptr.hbm [resolvable:$true] %s189
          %s191 = sshll.u32 %s181, 4
          %s192 = int_to_ptr.vmem [resolvable:$true] %s191
          %194 = dma.hbm_to_vmem [thread:$0]  %s190, 16, %s192, %s163
          %s195 = sadd.s32 %s158, 2
          %s196 = sld [smem:[#allocation5 + %s195]]
          %s197 = scalar_lea.hbm %s2, %s196
          %s198 = sadd.s32 2, %s161
          %s199 = scalar_lea.vmem [#allocation2], %s198
          // Predicated region
          $region41: #{tpu_custom_call.1} parent=31 // pred_check
            _
          $region42: #{tpu_custom_call.1} parent=31 // pred_check_branch
            %201 = sbr.rel target = $region44
          $region43: #{tpu_custom_call.1} parent=31 // pred_region
            %202 = sst [smem:[#allocation12]] [#allocation17]
            %203 = sst [smem:[#allocation13]] [#allocation16]
          $region44: #{tpu_custom_call.1} parent=31 // pred_fallthru
            _
          %205 = shalt.err (0)
          %s207 = sshll.u32 %s197, 4
          %s208 = int_to_ptr.hbm [resolvable:$true] %s207
          %s209 = sshll.u32 %s199, 4
          %s210 = int_to_ptr.vmem [resolvable:$true] %s209
          %212 = dma.hbm_to_vmem [thread:$0]  %s208, 16, %s210, %s163
          %s213 = sadd.s32 %s158, 3
          %s214 = sld [smem:[#allocation5 + %s213]]
          %s215 = scalar_lea.hbm %s2, %s214
          %s216 = sadd.s32 3, %s161
          %s217 = scalar_lea.vmem [#allocation2], %s216
          // Predicated region
          $region45: #{tpu_custom_call.1} parent=31 // pred_check
            _
          $region46: #{tpu_custom_call.1} parent=31 // pred_check_branch
            %219 = sbr.rel target = $region48
          $region47: #{tpu_custom_call.1} parent=31 // pred_region
            %220 = sst [smem:[#allocation12]] [#allocation19]
            %221 = sst [smem:[#allocation13]] [#allocation18]
          $region48: #{tpu_custom_call.1} parent=31 // pred_fallthru
            _
          %223 = shalt.err (0)
          %s225 = sshll.u32 %s215, 4
          %s226 = int_to_ptr.hbm [resolvable:$true] %s225
          %s227 = sshll.u32 %s217, 4
          %s228 = int_to_ptr.vmem [resolvable:$true] %s227
          %230 = dma.hbm_to_vmem [thread:$0]  %s226, 16, %s228, %s163
          %s231 = sadd.s32 %s158, 4
          %s232 = sld [smem:[#allocation5 + %s231]]
          %s233 = scalar_lea.hbm %s2, %s232
          %s234 = sadd.s32 4, %s161
          %s235 = scalar_lea.vmem [#allocation2], %s234
          // Predicated region
          $region49: #{tpu_custom_call.1} parent=31 // pred_check
            _
          $region50: #{tpu_custom_call.1} parent=31 // pred_check_branch
            %237 = sbr.rel target = $region52
          $region51: #{tpu_custom_call.1} parent=31 // pred_region
            %238 = sst [smem:[#allocation12]] [#allocation21]
            %239 = sst [smem:[#allocation13]] [#allocation20]
          $region52: #{tpu_custom_call.1} parent=31 // pred_fallthru
            _
          %241 = shalt.err (0)
          %s243 = sshll.u32 %s233, 4
          %s244 = int_to_ptr.hbm [resolvable:$true] %s243
          %s245 = sshll.u32 %s235, 4
          %s246 = int_to_ptr.vmem [resolvable:$true] %s245
          %248 = dma.hbm_to_vmem [thread:$0]  %s244, 16, %s246, %s163
          %s249 = sadd.s32 %s158, 5
          %s250 = sld [smem:[#allocation5 + %s249]]
          %s251 = scalar_lea.hbm %s2, %s250
          %s252 = sadd.s32 5, %s161
          %s253 = scalar_lea.vmem [#allocation2], %s252
          // Predicated region
          $region53: #{tpu_custom_call.1} parent=31 // pred_check
            _
          $region54: #{tpu_custom_call.1} parent=31 // pred_check_branch
            %255 = sbr.rel target = $region56
          $region55: #{tpu_custom_call.1} parent=31 // pred_region
            %256 = sst [smem:[#allocation12]] [#allocation23]
            %257 = sst [smem:[#allocation13]] [#allocation22]
          $region56: #{tpu_custom_call.1} parent=31 // pred_fallthru
            _
          %259 = shalt.err (0)
          %s261 = sshll.u32 %s251, 4
          %s262 = int_to_ptr.hbm [resolvable:$true] %s261
          %s263 = sshll.u32 %s253, 4
          %s264 = int_to_ptr.vmem [resolvable:$true] %s263
          %266 = dma.hbm_to_vmem [thread:$0]  %s262, 16, %s264, %s163
          %s267 = sadd.s32 %s158, 6
          %s268 = sld [smem:[#allocation5 + %s267]]
          %s269 = scalar_lea.hbm %s2, %s268
          %s270 = sadd.s32 6, %s161
          %s271 = scalar_lea.vmem [#allocation2], %s270
          // Predicated region
          $region57: #{tpu_custom_call.1} parent=31 // pred_check
            _
          $region58: #{tpu_custom_call.1} parent=31 // pred_check_branch
            %273 = sbr.rel target = $region60
          $region59: #{tpu_custom_call.1} parent=31 // pred_region
            %274 = sst [smem:[#allocation12]] [#allocation25]
            %275 = sst [smem:[#allocation13]] [#allocation24]
          $region60: #{tpu_custom_call.1} parent=31 // pred_fallthru
            _
          %277 = shalt.err (0)
          %s279 = sshll.u32 %s269, 4
          %s280 = int_to_ptr.hbm [resolvable:$true] %s279
          %s281 = sshll.u32 %s271, 4
          %s282 = int_to_ptr.vmem [resolvable:$true] %s281
          %284 = dma.hbm_to_vmem [thread:$0]  %s280, 16, %s282, %s163
          %s285 = sadd.s32 %s158, 7
          %s286 = sld [smem:[#allocation5 + %s285]]
          %s287 = scalar_lea.hbm %s2, %s286
          %s288 = sadd.s32 7, %s161
          %s289 = scalar_lea.vmem [#allocation2], %s288
          // Predicated region
          $region61: #{tpu_custom_call.1} parent=31 // pred_check
            _
          $region62: #{tpu_custom_call.1} parent=31 // pred_check_branch
            %291 = sbr.rel target = $region64
          $region63: #{tpu_custom_call.1} parent=31 // pred_region
            %292 = sst [smem:[#allocation12]] [#allocation27]
            %293 = sst [smem:[#allocation13]] [#allocation26]
          $region64: #{tpu_custom_call.1} parent=31 // pred_fallthru
            _
          %295 = shalt.err (0)
          %s297 = sshll.u32 %s287, 4
          %s298 = int_to_ptr.hbm [resolvable:$true] %s297
          %s299 = sshll.u32 %s289, 4
          %s300 = int_to_ptr.vmem [resolvable:$true] %s299
          %302 = dma.hbm_to_vmem [thread:$0]  %s298, 16, %s300, %s163
        $region32: #{tpu_custom_call.1} parent=23 // pred_fallthru
          _
        %s303 = sadd.s32 %s31, 1
        %p304 = scmp.lt.s32.totalorder %s303, 2
        // Predicated region
        $region65: #{tpu_custom_call.1} parent=23 // pred_check
          %p305 = pneg %p304
        $region66: #{tpu_custom_call.1} parent=23 // pred_check_branch
          %307 = sbr.rel (%p305) target = $region68
        $region67: #{tpu_custom_call.1} parent=23 // pred_region
          %s308 = sadd.s32 %s139, 1
          %s309 = ssub.s32 1, %s151
          %p310 = scmp.lt.s32.totalorder %s308, 3
          %s311 = scalar_select %p310, %s308, 3
          %s312 = smul.u32 %s311, 8
          %s313 = sld [smem:[#allocation5 + %s312]]
          %s314 = scalar_lea.hbm %s2, %s313
          %s315 = smul.u32 %s309, 8
          %s316 = scalar_lea.vmem [#allocation2], %s315
          %s317 = scalar_lea.sflag [#allocation3], %s309
          // Predicated region
          $region69: #{tpu_custom_call.1} parent=67 // pred_check
            _
          $region70: #{tpu_custom_call.1} parent=67 // pred_check_branch
            %319 = sbr.rel target = $region72
          $region71: #{tpu_custom_call.1} parent=67 // pred_region
            %320 = sst [smem:[#allocation12]] [#allocation29]
            %321 = sst [smem:[#allocation13]] [#allocation28]
          $region72: #{tpu_custom_call.1} parent=67 // pred_fallthru
            _
          %323 = shalt.err (0)
          %s325 = sshll.u32 %s314, 4
          %s326 = int_to_ptr.hbm [resolvable:$true] %s325
          %s327 = sshll.u32 %s316, 4
          %s328 = int_to_ptr.vmem [resolvable:$true] %s327
          %330 = dma.hbm_to_vmem [thread:$0]  %s326, 16, %s328, %s317
          %s331 = sadd.s32 %s312, 1
          %s332 = sld [smem:[#allocation5 + %s331]]
          %s333 = scalar_lea.hbm %s2, %s332
          %s334 = sadd.s32 1, %s315
          %s335 = scalar_lea.vmem [#allocation2], %s334
          // Predicated region
          $region73: #{tpu_custom_call.1} parent=67 // pred_check
            _
          $region74: #{tpu_custom_call.1} parent=67 // pred_check_branch
            %337 = sbr.rel target = $region76
          $region75: #{tpu_custom_call.1} parent=67 // pred_region
            %338 = sst [smem:[#allocation12]] [#allocation31]
            %339 = sst [smem:[#allocation13]] [#allocation30]
          $region76: #{tpu_custom_call.1} parent=67 // pred_fallthru
            _
          %341 = shalt.err (0)
          %s343 = sshll.u32 %s333, 4
          %s344 = int_to_ptr.hbm [resolvable:$true] %s343
          %s345 = sshll.u32 %s335, 4
          %s346 = int_to_ptr.vmem [resolvable:$true] %s345
          %348 = dma.hbm_to_vmem [thread:$0]  %s344, 16, %s346, %s317
          %s349 = sadd.s32 %s312, 2
          %s350 = sld [smem:[#allocation5 + %s349]]
          %s351 = scalar_lea.hbm %s2, %s350
          %s352 = sadd.s32 2, %s315
          %s353 = scalar_lea.vmem [#allocation2], %s352
          // Predicated region
          $region77: #{tpu_custom_call.1} parent=67 // pred_check
            _
          $region78: #{tpu_custom_call.1} parent=67 // pred_check_branch
            %355 = sbr.rel target = $region80
          $region79: #{tpu_custom_call.1} parent=67 // pred_region
            %356 = sst [smem:[#allocation12]] [#allocation33]
            %357 = sst [smem:[#allocation13]] [#allocation32]
          $region80: #{tpu_custom_call.1} parent=67 // pred_fallthru
            _
          %359 = shalt.err (0)
          %s361 = sshll.u32 %s351, 4
          %s362 = int_to_ptr.hbm [resolvable:$true] %s361
          %s363 = sshll.u32 %s353, 4
          %s364 = int_to_ptr.vmem [resolvable:$true] %s363
          %366 = dma.hbm_to_vmem [thread:$0]  %s362, 16, %s364, %s317
          %s367 = sadd.s32 %s312, 3
          %s368 = sld [smem:[#allocation5 + %s367]]
          %s369 = scalar_lea.hbm %s2, %s368
          %s370 = sadd.s32 3, %s315
          %s371 = scalar_lea.vmem [#allocation2], %s370
          // Predicated region
          $region81: #{tpu_custom_call.1} parent=67 // pred_check
            _
          $region82: #{tpu_custom_call.1} parent=67 // pred_check_branch
            %373 = sbr.rel target = $region84
          $region83: #{tpu_custom_call.1} parent=67 // pred_region
            %374 = sst [smem:[#allocation12]] [#allocation35]
            %375 = sst [smem:[#allocation13]] [#allocation34]
          $region84: #{tpu_custom_call.1} parent=67 // pred_fallthru
            _
          %377 = shalt.err (0)
          %s379 = sshll.u32 %s369, 4
          %s380 = int_to_ptr.hbm [resolvable:$true] %s379
          %s381 = sshll.u32 %s371, 4
          %s382 = int_to_ptr.vmem [resolvable:$true] %s381
          %384 = dma.hbm_to_vmem [thread:$0]  %s380, 16, %s382, %s317
          %s385 = sadd.s32 %s312, 4
          %s386 = sld [smem:[#allocation5 + %s385]]
          %s387 = scalar_lea.hbm %s2, %s386
          %s388 = sadd.s32 4, %s315
          %s389 = scalar_lea.vmem [#allocation2], %s388
          // Predicated region
          $region85: #{tpu_custom_call.1} parent=67 // pred_check
            _
          $region86: #{tpu_custom_call.1} parent=67 // pred_check_branch
            %391 = sbr.rel target = $region88
          $region87: #{tpu_custom_call.1} parent=67 // pred_region
            %392 = sst [smem:[#allocation12]] [#allocation37]
            %393 = sst [smem:[#allocation13]] [#allocation36]
          $region88: #{tpu_custom_call.1} parent=67 // pred_fallthru
            _
          %395 = shalt.err (0)
          %s397 = sshll.u32 %s387, 4
          %s398 = int_to_ptr.hbm [resolvable:$true] %s397
          %s399 = sshll.u32 %s389, 4
          %s400 = int_to_ptr.vmem [resolvable:$true] %s399
          %402 = dma.hbm_to_vmem [thread:$0]  %s398, 16, %s400, %s317
          %s403 = sadd.s32 %s312, 5
          %s404 = sld [smem:[#allocation5 + %s403]]
          %s405 = scalar_lea.hbm %s2, %s404
          %s406 = sadd.s32 5, %s315
          %s407 = scalar_lea.vmem [#allocation2], %s406
          // Predicated region
          $region89: #{tpu_custom_call.1} parent=67 // pred_check
            _
          $region90: #{tpu_custom_call.1} parent=67 // pred_check_branch
            %409 = sbr.rel target = $region92
          $region91: #{tpu_custom_call.1} parent=67 // pred_region
            %410 = sst [smem:[#allocation12]] [#allocation39]
            %411 = sst [smem:[#allocation13]] [#allocation38]
          $region92: #{tpu_custom_call.1} parent=67 // pred_fallthru
            _
          %413 = shalt.err (0)
          %s415 = sshll.u32 %s405, 4
          %s416 = int_to_ptr.hbm [resolvable:$true] %s415
          %s417 = sshll.u32 %s407, 4
          %s418 = int_to_ptr.vmem [resolvable:$true] %s417
          %420 = dma.hbm_to_vmem [thread:$0]  %s416, 16, %s418, %s317
          %s421 = sadd.s32 %s312, 6
          %s422 = sld [smem:[#allocation5 + %s421]]
          %s423 = scalar_lea.hbm %s2, %s422
          %s424 = sadd.s32 6, %s315
          %s425 = scalar_lea.vmem [#allocation2], %s424
          // Predicated region
          $region93: #{tpu_custom_call.1} parent=67 // pred_check
            _
          $region94: #{tpu_custom_call.1} parent=67 // pred_check_branch
            %427 = sbr.rel target = $region96
          $region95: #{tpu_custom_call.1} parent=67 // pred_region
            %428 = sst [smem:[#allocation12]] [#allocation41]
            %429 = sst [smem:[#allocation13]] [#allocation40]
          $region96: #{tpu_custom_call.1} parent=67 // pred_fallthru
            _
          %431 = shalt.err (0)
          %s433 = sshll.u32 %s423, 4
          %s434 = int_to_ptr.hbm [resolvable:$true] %s433
          %s435 = sshll.u32 %s425, 4
          %s436 = int_to_ptr.vmem [resolvable:$true] %s435
          %438 = dma.hbm_to_vmem [thread:$0]  %s434, 16, %s436, %s317
          %s439 = sadd.s32 %s312, 7
          %s440 = sld [smem:[#allocation5 + %s439]]
          %s441 = scalar_lea.hbm %s2, %s440
          %s442 = sadd.s32 7, %s315
          %s443 = scalar_lea.vmem [#allocation2], %s442
          // Predicated region
          $region97: #{tpu_custom_call.1} parent=67 // pred_check
            _
          $region98: #{tpu_custom_call.1} parent=67 // pred_check_branch
            %445 = sbr.rel target = $region100
          $region99: #{tpu_custom_call.1} parent=67 // pred_region
            %446 = sst [smem:[#allocation12]] [#allocation43]
            %447 = sst [smem:[#allocation13]] [#allocation42]
          $region100: #{tpu_custom_call.1} parent=67 // pred_fallthru
            _
          %449 = shalt.err (0)
          %s451 = sshll.u32 %s441, 4
          %s452 = int_to_ptr.hbm [resolvable:$true] %s451
          %s453 = sshll.u32 %s443, 4
          %s454 = int_to_ptr.vmem [resolvable:$true] %s453
          %456 = dma.hbm_to_vmem [thread:$0]  %s452, 16, %s454, %s317
        $region68: #{tpu_custom_call.1} parent=23 // pred_fallthru
          _
        %s457 = scalar_lea.sflag [#allocation3], %s151
        %s458 = smul.u32 1, 1
        %s459 = sshll.u32 %s458, 4
        %460 = dma.done %s457, %s459
        %s461 = sshll.u32 %s458, 4
        %462 = dma.done %s457, %s461
        %s463 = sshll.u32 %s458, 4
        %464 = dma.done %s457, %s463
        %s465 = sshll.u32 %s458, 4
        %466 = dma.done %s457, %s465
        %s467 = sshll.u32 %s458, 4
        %468 = dma.done %s457, %s467
        %s469 = sshll.u32 %s458, 4
        %470 = dma.done %s457, %s469
        %s471 = sshll.u32 %s458, 4
        %472 = dma.done %s457, %s471
        %s473 = sshll.u32 %s458, 4
        %474 = dma.done %s457, %s473
        %s475 = smul.u32 %s151, 8
        %s476 = scalar_lea.vmem [#allocation2], %s475
        %v477 = vld [vmem:[%s476] sm:$0xff]
        %v478 = vld [vmem:[#allocation6] sm:$0xff]
        %v479 = vadd.f32 %v477, %v478
        %480 = vst [vmem:[%s135] sm:$0xff] %v479
        %s481 = sand.u32 %s71, 1
        %s482 = scalar_lea.sflag [#allocation8], %s481
        %s483 = sand.u32 %s71, 1
        %s484 = smul.addr %s483, 8
        %s485 = scalar_lea.vmem [#allocation9], %s484
        // Predicated region
        $region101: #{tpu_custom_call.1} parent=23 // pred_check
          %p486 = pneg %p81
        $region102: #{tpu_custom_call.1} parent=23 // pred_check_branch
          %488 = sbr.rel (%p486) target = $region104
        $region103: #{tpu_custom_call.1} parent=23 // pred_region
          %s489 = smul.u32 %s30, 2
          %s490 = sadd.s32 %s489, %s31
          %492 = vsyncadd %s482, 0
          %s493 = smul.addr %s490, 8
          %s494 = scalar_lea.hbm %s3, %s493
          %s496 = sshll.u32 %s485, 4
          %s497 = int_to_ptr.vmem [resolvable:$true] %s496
          %s498 = sshll.u32 %s494, 4
          %s499 = int_to_ptr.hbm [resolvable:$true] %s498
          %501 = dma.vmem_to_hbm [thread:$0]  %s497, 128, %s499, %s482
        $region104: #{tpu_custom_call.1} parent=23 // pred_fallthru
          _
      $region24: #{tpu_custom_call.1} parent=5 // pred_fallthru
        _
      %p502 = scmp.le.s32.totalorder 2, %s21
      // Predicated region
      $region105: #{tpu_custom_call.1} parent=5 // pred_check
        %p503 = pneg %p502
      $region106: #{tpu_custom_call.1} parent=5 // pred_check_branch
        %505 = sbr.rel (%p503) target = $region108
      $region107: #{tpu_custom_call.1} parent=5 // pred_region
        %s506 = ssub.s32 %s21, 2
        // Predicated region
        $region109: #{tpu_custom_call.1} parent=107 // pred_check
          %p507 = pneg %p87
        $region110: #{tpu_custom_call.1} parent=107 // pred_check_branch
          %509 = sbr.rel (%p507) target = $region112
        $region111: #{tpu_custom_call.1} parent=107 // pred_region
          %s510 = sand.u32 %s72, 1
          %s511 = scalar_lea.sflag [#allocation8], %s510
          %s512 = sand.u32 %s72, 1
          %s513 = smul.addr %s512, 8
          %s514 = scalar_lea.vmem [#allocation9], %s513
          %516 = dma.done %s511, 128
        $region112: #{tpu_custom_call.1} parent=107 // pred_fallthru
          _
      $region108: #{tpu_custom_call.1} parent=5 // pred_fallthru
        _
    $region6: #{tpu_custom_call.1} parent=1 // loop_footer
      %s25 = sadd.s32 1, %s21
    $region7: #{tpu_custom_call.1} parent=1 // loop_footer_branch
      %20 = sbr.rel target = $region3
    $region8: #{tpu_custom_call.1} parent=1 // loop_exit
      _
    %517 = vsyncpa [#allocation7], 1
    %s518 = scalar_lea.sflag [#allocation7], 1
    %519 = vsyncpa %s518, 1
    %520 = vsyncpa [#allocation8], 1
    %s521 = scalar_lea.sflag [#allocation8], 1
    %522 = vsyncpa %s521, 1
  %523 = vsyncmov [#allocation3]
  %s524 = vpop.sfrf %523
  %p525 = scmp.eq.s32.totalorder %s524, 0
  %p526 = pneg %p525
  %528 = shalt.err (%p526)
  %s529 = scalar_lea.sflag [#allocation3], 1
  %530 = vsyncmov %s529
  %s531 = vpop.sfrf %530
  %p532 = scmp.eq.s32.totalorder %s531, 0
  %p533 = pneg %p532
  %535 = shalt.err (%p533)

</llo_original>
